<compile_context>
chip_gen: v6e
topology: v6e:2x2x1
jax: 0.10.0
libtpu: 0.0.40
codegen_flags: <defaults>
</compile_context>

<pallas_src>
import jax
import jax.numpy as jnp
from jax.experimental import pallas as pl
from jax.experimental.pallas import tpu as pltpu

LANE = 128              # lane width
SUBLANE = 8             # sublane granule
MAX_BLOCK_ROWS = 4096   # 4096 x 128 x 4B = 2 MiB per f32 input block


def _bce_partial_kernel(x_ref, t_ref, o_ref):
    """Per-block, lane-dense partial sum of stable BCE-with-logits loss."""
    x = x_ref[...].astype(jnp.float32)
    # x * (target > 0.5).float()  as one cmp+select (no convert + multiply).
    x_t = jnp.where(t_ref[...] > 0.5, x, 0.0)
    # Stable BCE with logits: max(x, 0) - x*t + log1p(exp(-|x|))
    loss = jnp.maximum(x, 0.0) - x_t + jnp.log1p(jnp.exp(-jnp.abs(x)))
    # Reduce only over the sublane (row) axis -> (1, LANE) lane-dense store.
    o_ref[...] = jnp.sum(loss, axis=0, keepdims=True).reshape(1, 1, LANE)


def _bce_elementwise(x, t):
    """Pure-JAX per-element loss (used for the small unaligned tail)."""
    x = x.astype(jnp.float32)
    x_t = jnp.where(t > 0.5, x, jnp.float32(0.0))
    return jnp.maximum(x, 0.0) - x_t + jnp.log1p(jnp.exp(-jnp.abs(x)))


@jax.jit
def bce_with_logits_loss(logits, target):
    """Equivalent of BCELoss.forward: mean BCEWithLogits on binarized target."""
    assert logits.shape == target.shape
    total = int(logits.size)
    if total == 0:  # guard mean-of-empty (0/0)
        return jnp.float32(0.0)

    x_flat = logits.reshape(-1)   # contiguous row-major reshape: free bitcast
    t_flat = target.reshape(-1)

    rows_total = total // LANE
    if rows_total >= 2 * SUBLANE:
        # Aim for blocks of <= MAX_BLOCK_ROWS rows, but at least 2 blocks so
        # the "parallel" grid can be sharded across v7x's two TensorCores.
        n_blocks = max(2, pl.cdiv(rows_total, MAX_BLOCK_ROWS))
        block_r = max(SUBLANE, (rows_total // n_blocks) // SUBLANE * SUBLANE)
        n_blocks = rows_total // block_r          # maximize kernel coverage
    elif rows_total >= SUBLANE:
        block_r = SUBLANE
        n_blocks = rows_total // SUBLANE          # single small block
    else:
        block_r, n_blocks = 0, 0                  # tiny input: pure-JAX only

    kernel_elems = n_blocks * block_r * LANE
    tail = total - kernel_elems                   # < ~9*n_blocks*128 elements

    total_sum = jnp.float32(0.0)

    if n_blocks > 0:
        if tail:
            xk, tk = x_flat[:kernel_elems], t_flat[:kernel_elems]
        else:
            xk, tk = x_flat, t_flat
        x2d = xk.reshape(n_blocks * block_r, LANE)
        t2d = tk.reshape(n_blocks * block_r, LANE)

        in_bytes = kernel_elems * (x2d.dtype.itemsize + t2d.dtype.itemsize)
        partials = pl.pallas_call(
            _bce_partial_kernel,
            out_shape=jax.ShapeDtypeStruct((n_blocks, 1, LANE), jnp.float32),
            grid_spec=pltpu.PrefetchScalarGridSpec(
                num_scalar_prefetch=0,
                grid=(n_blocks,),
                in_specs=[
                    pl.BlockSpec((block_r, LANE), lambda i: (i, 0)),
                    pl.BlockSpec((block_r, LANE), lambda i: (i, 0)),
                ],
                out_specs=pl.BlockSpec((1, 1, LANE), lambda i: (i, 0, 0)),
            ),
            compiler_params=pltpu.CompilerParams(
                dimension_semantics=("parallel",)),
            cost_estimate=pl.CostEstimate(
                flops=8 * kernel_elems,
                transcendentals=2 * kernel_elems,
                bytes_accessed=in_bytes + 4 * n_blocks * LANE),
        )(x2d, t2d)
        total_sum = total_sum + jnp.sum(partials, dtype=jnp.float32)

    if tail:
        total_sum = total_sum + jnp.sum(
            _bce_elementwise(x_flat[kernel_elems:], t_flat[kernel_elems:]),
            dtype=jnp.float32)

    return total_sum / jnp.float32(total)


if __name__ == "__main__":
    key = jax.random.PRNGKey(0)
    k1, k2 = jax.random.split(key)
    # NCHW inputs, small shapes consistent with the module
    logits = jax.random.normal(k1, (2, 4, 16, 16), dtype=jnp.float32)
    target = jax.random.uniform(k2, (2, 4, 16, 16), dtype=jnp.float32)

    loss = bce_with_logits_loss(logits, target)
    jax.block_until_ready(loss)

    # sanity check against pure-JAX reference (BCEWithLogitsLoss semantics)
    t = (target > 0.5).astype(jnp.float32)
    ref = jnp.mean(jnp.maximum(logits, 0.0) - logits * t
                   + jnp.log1p(jnp.exp(-jnp.abs(logits))))
    assert jnp.allclose(loss, ref, rtol=1e-5, atol=1e-6), (loss, ref)

    print("KERNEL_OK")
</pallas_src>

<mosaic_0001>
module attributes {stable_mosaic.version = 11 : i64} {
  func.func @_bce_partial_kernel(%arg0: i32, %arg1: memref<8x128xf32, #tpu.memory_space<vmem>>, %arg2: memref<8x128xf32, #tpu.memory_space<vmem>>, %arg3: memref<1x1x128xf32, #tpu.memory_space<vmem>>) attributes {dimension_semantics = [#tpu.dimension_semantics<parallel>], iteration_bounds = array<i64: 2>, scalar_prefetch = 0 : i64, scratch_operands = 0 : i64, tpu.core_type = #tpu.core_type<tc>, window_params = [{transform_indices = @transform_0, window_bounds = array<i64: 8, 128>}, {transform_indices = @transform_1, window_bounds = array<i64: 8, 128>}, {transform_indices = @transform_2, window_bounds = array<i64: 1, 1, 128>}]} {
    %c0 = arith.constant 0 : index
    %c0_0 = arith.constant 0 : index
    %0 = vector.load %arg1[%c0, %c0_0] : memref<8x128xf32, #tpu.memory_space<vmem>>, vector<8x128xf32>
    %c0_1 = arith.constant 0 : index
    %c0_2 = arith.constant 0 : index
    %1 = vector.load %arg2[%c0_1, %c0_2] : memref<8x128xf32, #tpu.memory_space<vmem>>, vector<8x128xf32>
    %cst = arith.constant 5.000000e-01 : f32
    %2 = vector.broadcast %cst : f32 to vector<8x128xf32>
    %3 = arith.cmpf ogt, %1, %2 : vector<8x128xf32>
    %cst_3 = arith.constant 0.000000e+00 : f32
    %4 = vector.broadcast %cst_3 : f32 to vector<8x128xf32>
    %5 = arith.select %3, %0, %4 : vector<8x128xi1>, vector<8x128xf32>
    %cst_4 = arith.constant 0.000000e+00 : f32
    %6 = vector.broadcast %cst_4 : f32 to vector<8x128xf32>
    %7 = arith.maximumf %0, %6 : vector<8x128xf32>
    %8 = arith.subf %7, %5 : vector<8x128xf32>
    %9 = math.absf %0 : vector<8x128xf32>
    %cst_5 = arith.constant 0.000000e+00 : f32
    %10 = vector.broadcast %cst_5 : f32 to vector<8x128xf32>
    %11 = arith.subf %10, %9 : vector<8x128xf32>
    %12 = math.exp %11 : vector<8x128xf32>
    %13 = math.log1p %12 : vector<8x128xf32>
    %14 = arith.addf %8, %13 : vector<8x128xf32>
    %cst_6 = arith.constant dense<0.000000e+00> : vector<128xf32>
    %15 = vector.multi_reduction <add>, %14, %cst_6 [0] : vector<8x128xf32> to vector<128xf32>
    %16 = vector.shape_cast %15 : vector<128xf32> to vector<1x128xf32>
    %17 = vector.shape_cast %16 : vector<1x128xf32> to vector<1x1x128xf32>
    %c0_7 = arith.constant 0 : index
    %c0_8 = arith.constant 0 : index
    %c0_9 = arith.constant 0 : index
    %18 = vector.load %arg3[%c0_7, %c0_8, %c0_9] : memref<1x1x128xf32, #tpu.memory_space<vmem>>, vector<1x1x128xf32>
    tpu.vector_store %arg3[%c0_7, %c0_8, %c0_9], %17 {strides = array<i32>} : memref<1x1x128xf32, #tpu.memory_space<vmem>>, vector<1x1x128xf32>,
    return
  }
  func.func @transform_0(%arg0: i32) -> (i32, i32) {
    %c0_i32 = arith.constant 0 : i32
    %c0_i32_0 = arith.constant 0 : i32
    return %arg0, %c0_i32 : i32, i32
  }
  func.func @transform_1(%arg0: i32) -> (i32, i32) {
    %c0_i32 = arith.constant 0 : i32
    %c0_i32_0 = arith.constant 0 : i32
    return %arg0, %c0_i32 : i32, i32
  }
  func.func @transform_2(%arg0: i32) -> (i32, i32, i32) {
    %c0_i32 = arith.constant 0 : i32
    %c0_i32_0 = arith.constant 0 : i32
    %c0_i32_1 = arith.constant 0 : i32
    return %arg0, %c0_i32, %c0_i32_0 : i32, i32, i32
  }
}

</mosaic_0001>

<llo_original>
// kernel: bce_with_logits_loss.1
$region0: #{bce_with_logits_loss.1}
  #allocation0 [shape = 'u32[]', space=smem, size = 0x4, offset = 0x4, fixed_abs, tag = 'smem constant byte address 0x4 - core index']
  #allocation1 [shape = 'u32[144,128]{1,0:T(1,128)}', space=vmem, size = 0x12000, scoped, tag = 'internal scratch']
  %s0 = inlined_call_operand.vmem [shape: f32[16,128], index: 0, kind: input, shape index: {}]
  %s1 = inlined_call_operand.vmem [shape: f32[16,128], index: 1, kind: input, shape index: {}]
  %s2 = inlined_call_operand.vmem [shape: f32[2,1,128], index: 2, kind: output, shape index: {}]
  %s3 = sld [smem:[#allocation0]]
  $region41: #{bce_with_logits_loss.1} parent=0
    _
  %s5 = ssub.s32 1, %s3
  %s6 = scalar_select 0, %s5, %s3
  loop: start=0, step=1, limit=4
  $region2: #{bce_with_logits_loss.1} parent=0 // loop_pre_header
    _
  $region3: #{bce_with_logits_loss.1} parent=0 // loop_header
    %s8 = sphi 0, %s12
    %p9 = scmp.ge.s32.totalorder %s8, 4
    %s18 = sphi 0, %s20
    %s21 = sphi 0, %s18
    %s22 = sphi 0, %s21
    %s38 = sphi 0, %s22
    %s44 = sphi 0, %s46
    %s47 = sphi 0, %s44
    %s48 = sphi 0, %s47
    %s64 = sphi 0, %s48
    %s70 = sphi 0, %s72
    %s73 = sphi 0, %s70
    %s74 = sphi 0, %s73
    %s90 = sphi 0, %s74
  $region4: #{bce_with_logits_loss.1} parent=0 // loop_header_branch
    %11 = sbr.rel (%p9) target = $region8
  $region5: #{bce_with_logits_loss.1} parent=0 // loop_body
    %s13 = ssub.s32 %s8, 1
    %s14 = ssub.s32 %s8, 2
    %s15 = sadd.s32 %s8, 1
    %s16 = ssub.s32 %s8, %s15
    %p17 = scmp.eq.s32.totalorder %s16, 0
    %s19 = sadd.s32 %s18, 1
    %s20 = scalar_select %p17, %s18, %s19
    %p23 = pneg %p17
    %p24 = scmp.eq.s32.totalorder %s8, 1
    %p25 = por %p23, %p24
    %p26 = scmp.ne.s32.totalorder %s18, %s21
    %p27 = scmp.eq.s32.totalorder %s8, 0
    %p28 = por %p26, %p27
    %p29 = scmp.ne.s32.totalorder %s18, %s21
    %p30 = scmp.eq.s32.totalorder %s13, 1
    %p31 = por %p29, %p30
    %p32 = scmp.ne.s32.totalorder %s21, %s22
    %p33 = scmp.eq.s32.totalorder %s13, 0
    %p34 = por %p32, %p33
    %p35 = scmp.ne.s32.totalorder %s21, %s22
    %p36 = scmp.eq.s32.totalorder %s14, 1
    %p37 = por %p35, %p36
    %p39 = scmp.ne.s32.totalorder %s22, %s38
    %p40 = scmp.eq.s32.totalorder %s14, 0
    %p41 = por %p39, %p40
    %s42 = ssub.s32 %s8, %s15
    %p43 = scmp.eq.s32.totalorder %s42, 0
    %s45 = sadd.s32 %s44, 1
    %s46 = scalar_select %p43, %s44, %s45
    %p49 = pneg %p43
    %p50 = scmp.eq.s32.totalorder %s8, 1
    %p51 = por %p49, %p50
    %p52 = scmp.ne.s32.totalorder %s44, %s47
    %p53 = scmp.eq.s32.totalorder %s8, 0
    %p54 = por %p52, %p53
    %p55 = scmp.ne.s32.totalorder %s44, %s47
    %p56 = scmp.eq.s32.totalorder %s13, 1
    %p57 = por %p55, %p56
    %p58 = scmp.ne.s32.totalorder %s47, %s48
    %p59 = scmp.eq.s32.totalorder %s13, 0
    %p60 = por %p58, %p59
    %p61 = scmp.ne.s32.totalorder %s47, %s48
    %p62 = scmp.eq.s32.totalorder %s14, 1
    %p63 = por %p61, %p62
    %p65 = scmp.ne.s32.totalorder %s48, %s64
    %p66 = scmp.eq.s32.totalorder %s14, 0
    %p67 = por %p65, %p66
    %s68 = ssub.s32 %s8, %s15
    %p69 = scmp.eq.s32.totalorder %s68, 0
    %s71 = sadd.s32 %s70, 1
    %s72 = scalar_select %p69, %s70, %s71
    %p75 = pneg %p69
    %p76 = scmp.eq.s32.totalorder %s8, 1
    %p77 = por %p75, %p76
    %p78 = scmp.ne.s32.totalorder %s70, %s73
    %p79 = scmp.eq.s32.totalorder %s8, 0
    %p80 = por %p78, %p79
    %p81 = scmp.ne.s32.totalorder %s70, %s73
    %p82 = scmp.eq.s32.totalorder %s13, 1
    %p83 = por %p81, %p82
    %p84 = scmp.ne.s32.totalorder %s73, %s74
    %p85 = scmp.eq.s32.totalorder %s13, 0
    %p86 = por %p84, %p85
    %p87 = scmp.ne.s32.totalorder %s73, %s74
    %p88 = scmp.eq.s32.totalorder %s14, 1
    %p89 = por %p87, %p88
    %p91 = scmp.ne.s32.totalorder %s74, %s90
    %p92 = scmp.eq.s32.totalorder %s14, 0
    %p93 = por %p91, %p92
    %p94 = scmp.le.s32.totalorder 1, %s8
    %p95 = scmp.lt.s32.totalorder %s8, 3
    %p96 = pnand %p94, %p95
    %p97 = pneg %p96
    // Predicated region
    $region9: #{bce_with_logits_loss.1} parent=5 // pred_check
      _
    $region10: #{bce_with_logits_loss.1} parent=5 // pred_check_branch
      %99 = sbr.rel (%p96) target = $region12
    $region11: #{bce_with_logits_loss.1} parent=5 // pred_region
      %s100 = ssub.s32 %s8, 1
    $region12: #{bce_with_logits_loss.1} parent=5 // pred_fallthru
      _
    %p101 = scmp.lt.s32.totalorder %s8, 2
    // Predicated region
    $region13: #{bce_with_logits_loss.1} parent=5 // pred_check
      %p102 = pneg %p101
    $region14: #{bce_with_logits_loss.1} parent=5 // pred_check_branch
      %104 = sbr.rel (%p102) target = $region16
    $region15: #{bce_with_logits_loss.1} parent=5 // pred_region
      // Predicated region
      $region17: #{bce_with_logits_loss.1} parent=15 // pred_check
        %p105 = pneg %p28
      $region18: #{bce_with_logits_loss.1} parent=15 // pred_check_branch
        %107 = sbr.rel (%p105) target = $region20
      $region19: #{bce_with_logits_loss.1} parent=15 // pred_region
        %p108 = scmp.lt.s32.totalorder %s8, 1
        %s109 = scalar_select %p108, %s8, 1
        %s110 = smul.addr %s109, 8
        %s111 = scalar_lea.vmem %s0, %s110
      $region20: #{bce_with_logits_loss.1} parent=15 // pred_fallthru
        _
      // Predicated region
      $region21: #{bce_with_logits_loss.1} parent=15 // pred_check
        %p112 = pneg %p54
      $region22: #{bce_with_logits_loss.1} parent=15 // pred_check_branch
        %114 = sbr.rel (%p112) target = $region24
      $region23: #{bce_with_logits_loss.1} parent=15 // pred_region
        %p115 = scmp.lt.s32.totalorder %s8, 1
        %s116 = scalar_select %p115, %s8, 1
        %s117 = smul.addr %s116, 8
        %s118 = scalar_lea.vmem %s1, %s117
      $region24: #{bce_with_logits_loss.1} parent=15 // pred_fallthru
        _
    $region16: #{bce_with_logits_loss.1} parent=5 // pred_fallthru
      _
    %p119 = scmp.le.s32.totalorder 1, %s8
    %p120 = scmp.lt.s32.totalorder %s8, 3
    %p121 = pnand %p119, %p120
    %p122 = pneg %p121
    // Predicated region
    $region25: #{bce_with_logits_loss.1} parent=5 // pred_check
      _
    $region26: #{bce_with_logits_loss.1} parent=5 // pred_check_branch
      %124 = sbr.rel (%p121) target = $region28
    $region27: #{bce_with_logits_loss.1} parent=5 // pred_region
      %s125 = ssub.s32 %s8, 1
      %p126 = scmp.lt.s32.totalorder %s13, 1
      %s127 = scalar_select %p126, %s13, 1
      %s128 = smul.addr %s127, 8
      %s129 = scalar_lea.vmem %s0, %s128
      %p130 = pneg %p34
      %p131 = pneg %p31
      %p132 = scmp.lt.s32.totalorder %s13, 1
      %s133 = scalar_select %p132, %s13, 1
      %s134 = smul.addr %s133, 8
      %s135 = scalar_lea.vmem %s1, %s134
      %p136 = pneg %p60
      %p137 = pneg %p57
      %p138 = pneg %p86
      %p139 = pneg %p83
      %p140 = scmp.lt.s32.totalorder %s13, 1
      %s141 = scalar_select %p140, %s13, 1
      %s142 = scalar_lea.vmem %s2, %s141
      %p143 = scmp.lt.s32.totalorder %s13, 1
      %s144 = scalar_select %p143, %s13, 1
      %s145 = smul.addr %s144, 8
      %s146 = scalar_lea.vmem %s0, %s145
      %p147 = scmp.lt.s32.totalorder %s13, 1
      %s148 = scalar_select %p147, %s13, 1
      %s149 = smul.addr %s148, 8
      %s150 = scalar_lea.vmem %s1, %s149
      %p151 = scmp.lt.s32.totalorder %s13, 1
      %s152 = scalar_select %p151, %s13, 1
      %s153 = scalar_lea.vmem %s2, %s152
      %v154 = vld [vmem:[%s146] sm:$0xff]
      %v155 = vld [vmem:[%s150] sm:$0xff]
      %vm156 = vcmp.gt.f32.partialorder %v155, 0.5
      %v157 = vsel %vm156, %v154, 0.0
      %v158 = vmax.f32 %v154, 0.0
      %v159 = vsub.f32 %v158, %v157
      %v160 = vand.u32 2147483647, %v154
      %v161 = vsub.f32 0.0, %v160
      %v162 = vmul.f32 %v161, 1.442695
      %v163 = vpow.pop %v162
      %v164 = vadd.f32 %v163, 1.0
      %v165 = vlog2.pop %v164
      %v166 = vmul.f32 %v165, 0.6931472
      %v167 = vmul.f32 -0.5, %v163
      %v168 = vadd.f32 %v167, 1.0
      %v169 = vmul.f32 %v168, %v163
      %v170 = vand.u32 2147483647, %v163
      %vm171 = vcmp.lt.f32.partialorder %v170, 0.0004427343
      %v172 = vsel %vm171, %v169, %v166
      %v173 = vadd.f32 %v159, %v172
      %v174 = vrot.slane %v173, 4
      %v175 = vadd.f32 %v173, %v174
      %v176 = vrot.slane %v175, 2
      %v177 = vadd.f32 %v175, %v176
      %v178 = vrot.slane %v177, 1
      %v179 = vadd.f32 %v177, %v178
      %180 = vst [vmem:[%s153] sm:$0x1] %v179
      %p181 = scmp.lt.s32.totalorder %s13, 1
      %s182 = scalar_select %p181, %s13, 1
      %s183 = scalar_lea.vmem %s2, %s182
      // Predicated region
      $region29: #{bce_with_logits_loss.1} parent=27 // pred_check
        %p184 = pneg %p83
      $region30: #{bce_with_logits_loss.1} parent=27 // pred_check_branch
        %186 = sbr.rel (%p184) target = $region32
      $region31: #{bce_with_logits_loss.1} parent=27 // pred_region
        _
      $region32: #{bce_with_logits_loss.1} parent=27 // pred_fallthru
        _
    $region28: #{bce_with_logits_loss.1} parent=5 // pred_fallthru
      _
    %p187 = scmp.le.s32.totalorder 2, %s8
    // Predicated region
    $region33: #{bce_with_logits_loss.1} parent=5 // pred_check
      %p188 = pneg %p187
    $region34: #{bce_with_logits_loss.1} parent=5 // pred_check_branch
      %190 = sbr.rel (%p188) target = $region36
    $region35: #{bce_with_logits_loss.1} parent=5 // pred_region
      %s191 = ssub.s32 %s8, 2
      // Predicated region
      $region37: #{bce_with_logits_loss.1} parent=35 // pred_check
        %p192 = pneg %p89
      $region38: #{bce_with_logits_loss.1} parent=35 // pred_check_branch
        %194 = sbr.rel (%p192) target = $region40
      $region39: #{bce_with_logits_loss.1} parent=35 // pred_region
        %p195 = scmp.lt.s32.totalorder %s14, 1
        %s196 = scalar_select %p195, %s14, 1
        %s197 = scalar_lea.vmem %s2, %s196
      $region40: #{bce_with_logits_loss.1} parent=35 // pred_fallthru
        _
    $region36: #{bce_with_logits_loss.1} parent=5 // pred_fallthru
      _
  $region6: #{bce_with_logits_loss.1} parent=0 // loop_footer
    %s12 = sadd.s32 1, %s8
  $region7: #{bce_with_logits_loss.1} parent=0 // loop_footer_branch
    %7 = sbr.rel target = $region3
  $region8: #{bce_with_logits_loss.1} parent=0 // loop_exit
    _

</llo_original>
